<compile_context>
chip_gen: v7x
topology: tpu7x:2x2x1
jax: 0.10.0
libtpu: 0.0.40
codegen_flags: <defaults>
</compile_context>

<pallas_src>
import functools

import jax
import jax.numpy as jnp
import numpy as np
from jax import lax
from jax.experimental import pallas as pl
from jax.experimental.pallas import tpu as pltpu


def _round_up(x, m):
    return ((x + m - 1) // m) * m


def lstm_recurrence_kernel(gx_ref, whh_ref, h_out_ref, h_sc, c_sc, *,
                           hidden_dim, t_block):
    """One grid step == T_BLK timesteps of one batch chunk.

    gx_ref  : (T_BLK, B_BLK, 4H)  precomputed x-path gates (+ all biases)
    whh_ref : (H, 4H)             recurrent weight (W_hh^T)
    h_out_ref: (T_BLK, B_BLK, H)  hidden states
    h_sc/c_sc: (B_BLK, H)         recurrent state carried across time chunks
    """
    H = hidden_dim

    # Reset state at the first time chunk of every batch chunk (time is the
    # inner / fastest grid axis).
    @pl.when(pl.program_id(1) == 0)
    def _():
        h_sc[...] = jnp.zeros_like(h_sc)
        c_sc[...] = jnp.zeros_like(c_sc)

    whh = whh_ref[...]                                   # load once per chunk

    def step(t, carry):
        h, c = carry
        gates = gx_ref[t] + jnp.dot(h, whh,
                                    preferred_element_type=jnp.float32)  # (B,4H)
        i_g = jax.nn.sigmoid(gates[:, 0 * H:1 * H])
        f_g = jax.nn.sigmoid(gates[:, 1 * H:2 * H])
        g_g = jnp.tanh(gates[:, 2 * H:3 * H])
        o_g = jax.nn.sigmoid(gates[:, 3 * H:4 * H])
        c_new = f_g * c + i_g * g_g
        h_new = o_g * jnp.tanh(c_new)
        h_out_ref[t] = h_new.astype(h_out_ref.dtype)
        return h_new, c_new

    h_f, c_f = lax.fori_loop(0, t_block, step, (h_sc[...], c_sc[...]),
                             unroll=True)
    h_sc[...] = h_f
    c_sc[...] = c_f


def lstm_classifier_forward(x, params, *, t_block=32):
    """x: (B, T, D) float32 -> (B, T, C) float32 (PyTorch batch_first)."""
    B, T, D = x.shape
    w_pre, b_pre, w_ih, w_hh, b_lstm, w_post, b_post = params
    H = w_hh.shape[0]

    # ---- hoisted non-recurrent compute: one big dense matmul over T*B rows ----
    feat = x.reshape(B * T, D) @ w_pre + b_pre               # (B*T, F)
    gates_x = feat @ w_ih + b_lstm                           # (B*T, 4H)
    gates_x = jnp.transpose(gates_x.reshape(B, T, 4 * H), (1, 0, 2))  # (T, B, 4H)

    # ---- pad batch to >=8 sublanes and time to a multiple of the time chunk ----
    Bp = _round_up(max(B, 8), 8)
    t_blk = min(T, t_block)
    Tp = _round_up(T, t_blk)
    if Bp > 128 and Bp % 128 == 0:
        b_blk = 128                                           # batch-chunk for v7x
    else:
        b_blk = Bp
    nb = Bp // b_blk
    nt = Tp // t_blk

    gates_x = jnp.pad(gates_x, ((0, Tp - T), (0, Bp - B), (0, 0)))

    kernel = functools.partial(lstm_recurrence_kernel, hidden_dim=H,
                               t_block=t_blk)

    h_all = pl.pallas_call(
        kernel,
        out_shape=jax.ShapeDtypeStruct((Tp, Bp, H), jnp.float32),
        grid_spec=pltpu.PrefetchScalarGridSpec(
            num_scalar_prefetch=0,
            grid=(nb, nt),
            in_specs=[
                pl.BlockSpec((t_blk, b_blk, 4 * H), lambda b, t: (t, b, 0)),
                pl.BlockSpec((H, 4 * H), lambda b, t: (0, 0)),     # W_hh^T
            ],
            out_specs=pl.BlockSpec((t_blk, b_blk, H), lambda b, t: (t, b, 0)),
            scratch_shapes=[
                pltpu.VMEM((b_blk, H), jnp.float32),               # h state
                pltpu.VMEM((b_blk, H), jnp.float32),               # c state
            ],
        ),
        compiler_params=pltpu.CompilerParams(
            dimension_semantics=("parallel", "arbitrary")),        # batch || time serial
    )(gates_x, w_hh)

    # ---- hoisted post_module: Linear(H -> C) over all rows at once ----
    h_bt = jnp.transpose(h_all[:T, :B, :], (1, 0, 2))        # (B, T, H)
    out = h_bt.reshape(B * T, H) @ w_post + b_post           # (B*T, C)
    return out.reshape(B, T, -1)


def reference_forward(x, params):
    """Pure-JAX reference matching PyTorch semantics."""
    w_pre, b_pre, w_ih, w_hh, b_lstm, w_post, b_post = params
    B, T, D = x.shape
    H = w_hh.shape[0]
    feat = x @ w_pre + b_pre                                 # (B, T, F)

    def step(carry, x_t):
        h, c = carry
        gates = x_t @ w_ih + h @ w_hh + b_lstm[0]
        i = jax.nn.sigmoid(gates[:, 0 * H:1 * H])
        f = jax.nn.sigmoid(gates[:, 1 * H:2 * H])
        g = jnp.tanh(gates[:, 2 * H:3 * H])
        o = jax.nn.sigmoid(gates[:, 3 * H:4 * H])
        c = f * c + i * g
        h = o * jnp.tanh(c)
        return (h, c), h

    h0 = jnp.zeros((B, H), jnp.float32)
    c0 = jnp.zeros((B, H), jnp.float32)
    _, hs = jax.lax.scan(step, (h0, c0), jnp.transpose(feat, (1, 0, 2)))
    hs = jnp.transpose(hs, (1, 0, 2))                        # (B, T, H)
    return hs @ w_post + b_post


def init_params(key, input_dim, feature_dim, hidden_dim, output_dim):
    """Deterministic uniform(-1/sqrt(fan), 1/sqrt(fan)) init a la PyTorch."""
    ks = jax.random.split(key, 7)
    u = lambda k, shape, bound: jax.random.uniform(
        k, shape, jnp.float32, minval=-bound, maxval=bound)
    b_pre_bound = 1.0 / np.sqrt(input_dim)
    b_lstm_bound = 1.0 / np.sqrt(hidden_dim)
    b_post_bound = 1.0 / np.sqrt(hidden_dim)
    w_pre = u(ks[0], (input_dim, feature_dim), b_pre_bound)          # W_pre^T
    b_pre = u(ks[1], (1, feature_dim), b_pre_bound)
    w_ih = u(ks[2], (feature_dim, 4 * hidden_dim), b_lstm_bound)     # W_ih^T
    w_hh = u(ks[3], (hidden_dim, 4 * hidden_dim), b_lstm_bound)      # W_hh^T
    b_lstm = u(ks[4], (1, 4 * hidden_dim), b_lstm_bound) * 2.0       # b_ih + b_hh
    w_post = u(ks[5], (hidden_dim, output_dim), b_post_bound)        # W_post^T
    b_post = u(ks[6], (1, output_dim), b_post_bound)
    return (w_pre, b_pre, w_ih, w_hh, b_lstm, w_post, b_post)


if __name__ == "__main__":
    B, T = 2, 8
    input_dim, feature_dim, hidden_dim, output_dim = 6, 16, 32, 4

    key = jax.random.PRNGKey(0)
    k_x, k_p = jax.random.split(key)
    x = jax.random.normal(k_x, (B, T, input_dim), jnp.float32)
    params = init_params(k_p, input_dim, feature_dim, hidden_dim, output_dim)

    out = lstm_classifier_forward(x, params)
    out = jax.block_until_ready(out)

    ref = jax.block_until_ready(reference_forward(x, params))
    assert out.shape == (B, T, output_dim)
    np.testing.assert_allclose(np.asarray(out), np.asarray(ref),
                               rtol=1e-5, atol=1e-5)
    print("KERNEL_OK")
</pallas_src>

<mosaic_0001>
module attributes {stable_mosaic.version = 11 : i64} {
  func.func @lstm_recurrence_kernel(%arg0: i32, %arg1: i32, %arg2: memref<8x8x128xf32, #tpu.memory_space<vmem>>, %arg3: memref<32x128xf32, #tpu.memory_space<vmem>>, %arg4: memref<8x8x32xf32, #tpu.memory_space<vmem>>, %arg5: memref<8x32xf32, #tpu.memory_space<vmem>>, %arg6: memref<8x32xf32, #tpu.memory_space<vmem>>) attributes {dimension_semantics = [#tpu.dimension_semantics<parallel>, #tpu.dimension_semantics<arbitrary>], iteration_bounds = array<i64: 1, 1>, scalar_prefetch = 0 : i64, scratch_operands = 2 : i64, tpu.core_type = #tpu.core_type<tc>, window_params = [{transform_indices = @transform_0, window_bounds = array<i64: 8, 8, 128>}, {pipeline_mode = #tpu.pipeline_mode<synchronous>, transform_indices = @transform_1, window_bounds = array<i64: 32, 128>}, {transform_indices = @transform_2, window_bounds = array<i64: 8, 8, 32>}]} {
    %c0_i32 = arith.constant 0 : i32
    %0 = arith.cmpi eq, %arg1, %c0_i32 : i32
    %1 = arith.extui %0 : i1 to i32
    %c0_i32_0 = arith.constant 0 : i32
    %2 = arith.cmpi ne, %1, %c0_i32_0 : i32
    scf.if %2 {
      %cst_74 = arith.constant 0.000000e+00 : f32
      %280 = vector.broadcast %cst_74 : f32 to vector<8x32xf32>
      %c0_75 = arith.constant 0 : index
      %c0_76 = arith.constant 0 : index
      %281 = vector.load %arg5[%c0_75, %c0_76] : memref<8x32xf32, #tpu.memory_space<vmem>>, vector<8x32xf32>
      tpu.vector_store %arg5[%c0_75, %c0_76], %280 {strides = array<i32>} : memref<8x32xf32, #tpu.memory_space<vmem>>, vector<8x32xf32>,
      %cst_77 = arith.constant 0.000000e+00 : f32
      %282 = vector.broadcast %cst_77 : f32 to vector<8x32xf32>
      %c0_78 = arith.constant 0 : index
      %c0_79 = arith.constant 0 : index
      %283 = vector.load %arg6[%c0_78, %c0_79] : memref<8x32xf32, #tpu.memory_space<vmem>>, vector<8x32xf32>
      tpu.vector_store %arg6[%c0_78, %c0_79], %282 {strides = array<i32>} : memref<8x32xf32, #tpu.memory_space<vmem>>, vector<8x32xf32>,
    } else {
    }
    %c0 = arith.constant 0 : index
    %c0_1 = arith.constant 0 : index
    %3 = vector.load %arg3[%c0, %c0_1] : memref<32x128xf32, #tpu.memory_space<vmem>>, vector<32x128xf32>
    %c0_2 = arith.constant 0 : index
    %c0_3 = arith.constant 0 : index
    %4 = vector.load %arg5[%c0_2, %c0_3] : memref<8x32xf32, #tpu.memory_space<vmem>>, vector<8x32xf32>
    %c0_4 = arith.constant 0 : index
    %c0_5 = arith.constant 0 : index
    %5 = vector.load %arg6[%c0_4, %c0_5] : memref<8x32xf32, #tpu.memory_space<vmem>>, vector<8x32xf32>
    %c0_i32_6 = arith.constant 0 : i32
    %6 = arith.index_cast %c0_i32_6 : i32 to index
    %c0_7 = arith.constant 0 : index
    %c0_8 = arith.constant 0 : index
    %7 = vector.load %arg2[%6, %c0_7, %c0_8] : memref<8x8x128xf32, #tpu.memory_space<vmem>>, vector<1x8x128xf32>
    %8 = vector.shape_cast %7 : vector<1x8x128xf32> to vector<8x128xf32>
    %cst = arith.constant dense<0.000000e+00> : vector<8x128xf32>
    %9 = tpu.matmul %4, %3, %cst {dimension_numbers = #tpu.dot_dimension_numbers<[1], [0], [0], [1], [0, 0, 1, 1], [], []>} : vector<8x32xf32>, vector<32x128xf32>, vector<8x128xf32> -> vector<8x128xf32>
    %10 = arith.addf %8, %9 : vector<8x128xf32>
    %11 = vector.extract_strided_slice %10 {offsets = [0, 0], sizes = [8, 32], strides = [1, 1]} : vector<8x128xf32> to vector<8x32xf32>
    %12 = arith.negf %11 : vector<8x32xf32>
    %13 = math.exp %12 : vector<8x32xf32>
    %cst_9 = arith.constant 1.000000e+00 : f32
    %14 = vector.broadcast %cst_9 : f32 to vector<8x32xf32>
    %15 = arith.addf %14, %13 : vector<8x32xf32>
    %16 = arith.divf %14, %15 : vector<8x32xf32>
    %17 = vector.extract_strided_slice %10 {offsets = [0, 32], sizes = [8, 32], strides = [1, 1]} : vector<8x128xf32> to vector<8x32xf32>
    %18 = arith.negf %17 : vector<8x32xf32>
    %19 = math.exp %18 : vector<8x32xf32>
    %cst_10 = arith.constant 1.000000e+00 : f32
    %20 = vector.broadcast %cst_10 : f32 to vector<8x32xf32>
    %21 = arith.addf %20, %19 : vector<8x32xf32>
    %22 = arith.divf %20, %21 : vector<8x32xf32>
    %23 = vector.extract_strided_slice %10 {offsets = [0, 64], sizes = [8, 32], strides = [1, 1]} : vector<8x128xf32> to vector<8x32xf32>
    %24 = math.tanh %23 : vector<8x32xf32>
    %25 = vector.extract_strided_slice %10 {offsets = [0, 96], sizes = [8, 32], strides = [1, 1]} : vector<8x128xf32> to vector<8x32xf32>
    %26 = arith.negf %25 : vector<8x32xf32>
    %27 = math.exp %26 : vector<8x32xf32>
    %cst_11 = arith.constant 1.000000e+00 : f32
    %28 = vector.broadcast %cst_11 : f32 to vector<8x32xf32>
    %29 = arith.addf %28, %27 : vector<8x32xf32>
    %30 = arith.divf %28, %29 : vector<8x32xf32>
    %31 = arith.mulf %22, %5 : vector<8x32xf32>
    %32 = arith.mulf %16, %24 : vector<8x32xf32>
    %33 = arith.addf %31, %32 : vector<8x32xf32>
    %34 = math.tanh %33 : vector<8x32xf32>
    %35 = arith.mulf %30, %34 : vector<8x32xf32>
    %36 = arith.index_cast %c0_i32_6 : i32 to index
    %c0_12 = arith.constant 0 : index
    %c0_13 = arith.constant 0 : index
    %37 = vector.load %arg4[%36, %c0_12, %c0_13] : memref<8x8x32xf32, #tpu.memory_space<vmem>>, vector<1x8x32xf32>
    %38 = vector.shape_cast %37 : vector<1x8x32xf32> to vector<8x32xf32>
    %39 = vector.shape_cast %35 : vector<8x32xf32> to vector<1x8x32xf32>
    tpu.vector_store %arg4[%36, %c0_12, %c0_13], %39 {strides = array<i32>} : memref<8x8x32xf32, #tpu.memory_space<vmem>>, vector<1x8x32xf32>,
    %c1_i32 = arith.constant 1 : i32
    %40 = arith.index_cast %c1_i32 : i32 to index
    %c0_14 = arith.constant 0 : index
    %c0_15 = arith.constant 0 : index
    %41 = vector.load %arg2[%40, %c0_14, %c0_15] : memref<8x8x128xf32, #tpu.memory_space<vmem>>, vector<1x8x128xf32>
    %42 = vector.shape_cast %41 : vector<1x8x128xf32> to vector<8x128xf32>
    %cst_16 = arith.constant dense<0.000000e+00> : vector<8x128xf32>
    %43 = tpu.matmul %35, %3, %cst_16 {dimension_numbers = #tpu.dot_dimension_numbers<[1], [0], [0], [1], [0, 0, 1, 1], [], []>} : vector<8x32xf32>, vector<32x128xf32>, vector<8x128xf32> -> vector<8x128xf32>
    %44 = arith.addf %42, %43 : vector<8x128xf32>
    %45 = vector.extract_strided_slice %44 {offsets = [0, 0], sizes = [8, 32], strides = [1, 1]} : vector<8x128xf32> to vector<8x32xf32>
    %46 = arith.negf %45 : vector<8x32xf32>
    %47 = math.exp %46 : vector<8x32xf32>
    %cst_17 = arith.constant 1.000000e+00 : f32
    %48 = vector.broadcast %cst_17 : f32 to vector<8x32xf32>
    %49 = arith.addf %48, %47 : vector<8x32xf32>
    %50 = arith.divf %48, %49 : vector<8x32xf32>
    %51 = vector.extract_strided_slice %44 {offsets = [0, 32], sizes = [8, 32], strides = [1, 1]} : vector<8x128xf32> to vector<8x32xf32>
    %52 = arith.negf %51 : vector<8x32xf32>
    %53 = math.exp %52 : vector<8x32xf32>
    %cst_18 = arith.constant 1.000000e+00 : f32
    %54 = vector.broadcast %cst_18 : f32 to vector<8x32xf32>
    %55 = arith.addf %54, %53 : vector<8x32xf32>
    %56 = arith.divf %54, %55 : vector<8x32xf32>
    %57 = vector.extract_strided_slice %44 {offsets = [0, 64], sizes = [8, 32], strides = [1, 1]} : vector<8x128xf32> to vector<8x32xf32>
    %58 = math.tanh %57 : vector<8x32xf32>
    %59 = vector.extract_strided_slice %44 {offsets = [0, 96], sizes = [8, 32], strides = [1, 1]} : vector<8x128xf32> to vector<8x32xf32>
    %60 = arith.negf %59 : vector<8x32xf32>
    %61 = math.exp %60 : vector<8x32xf32>
    %cst_19 = arith.constant 1.000000e+00 : f32
    %62 = vector.broadcast %cst_19 : f32 to vector<8x32xf32>
    %63 = arith.addf %62, %61 : vector<8x32xf32>
    %64 = arith.divf %62, %63 : vector<8x32xf32>
    %65 = arith.mulf %56, %33 : vector<8x32xf32>
    %66 = arith.mulf %50, %58 : vector<8x32xf32>
    %67 = arith.addf %65, %66 : vector<8x32xf32>
    %68 = math.tanh %67 : vector<8x32xf32>
    %69 = arith.mulf %64, %68 : vector<8x32xf32>
    %70 = arith.index_cast %c1_i32 : i32 to index
    %c0_20 = arith.constant 0 : index
    %c0_21 = arith.constant 0 : index
    %71 = vector.load %arg4[%70, %c0_20, %c0_21] : memref<8x8x32xf32, #tpu.memory_space<vmem>>, vector<1x8x32xf32>
    %72 = vector.shape_cast %71 : vector<1x8x32xf32> to vector<8x32xf32>
    %73 = vector.shape_cast %69 : vector<8x32xf32> to vector<1x8x32xf32>
    tpu.vector_store %arg4[%70, %c0_20, %c0_21], %73 {strides = array<i32>} : memref<8x8x32xf32, #tpu.memory_space<vmem>>, vector<1x8x32xf32>,
    %c2_i32 = arith.constant 2 : i32
    %74 = arith.index_cast %c2_i32 : i32 to index
    %c0_22 = arith.constant 0 : index
    %c0_23 = arith.constant 0 : index
    %75 = vector.load %arg2[%74, %c0_22, %c0_23] : memref<8x8x128xf32, #tpu.memory_space<vmem>>, vector<1x8x128xf32>
    %76 = vector.shape_cast %75 : vector<1x8x128xf32> to vector<8x128xf32>
    %cst_24 = arith.constant dense<0.000000e+00> : vector<8x128xf32>
    %77 = tpu.matmul %69, %3, %cst_24 {dimension_numbers = #tpu.dot_dimension_numbers<[1], [0], [0], [1], [0, 0, 1, 1], [], []>} : vector<8x32xf32>, vector<32x128xf32>, vector<8x128xf32> -> vector<8x128xf32>
    %78 = arith.addf %76, %77 : vector<8x128xf32>
    %79 = vector.extract_strided_slice %78 {offsets = [0, 0], sizes = [8, 32], strides = [1, 1]} : vector<8x128xf32> to vector<8x32xf32>
    %80 = arith.negf %79 : vector<8x32xf32>
    %81 = math.exp %80 : vector<8x32xf32>
    %cst_25 = arith.constant 1.000000e+00 : f32
    %82 = vector.broadcast %cst_25 : f32 to vector<8x32xf32>
    %83 = arith.addf %82, %81 : vector<8x32xf32>
    %84 = arith.divf %82, %83 : vector<8x32xf32>
    %85 = vector.extract_strided_slice %78 {offsets = [0, 32], sizes = [8, 32], strides = [1, 1]} : vector<8x128xf32> to vector<8x32xf32>
    %86 = arith.negf %85 : vector<8x32xf32>
    %87 = math.exp %86 : vector<8x32xf32>
    %cst_26 = arith.constant 1.000000e+00 : f32
    %88 = vector.broadcast %cst_26 : f32 to vector<8x32xf32>
    %89 = arith.addf %88, %87 : vector<8x32xf32>
    %90 = arith.divf %88, %89 : vector<8x32xf32>
    %91 = vector.extract_strided_slice %78 {offsets = [0, 64], sizes = [8, 32], strides = [1, 1]} : vector<8x128xf32> to vector<8x32xf32>
    %92 = math.tanh %91 : vector<8x32xf32>
    %93 = vector.extract_strided_slice %78 {offsets = [0, 96], sizes = [8, 32], strides = [1, 1]} : vector<8x128xf32> to vector<8x32xf32>
    %94 = arith.negf %93 : vector<8x32xf32>
    %95 = math.exp %94 : vector<8x32xf32>
    %cst_27 = arith.constant 1.000000e+00 : f32
    %96 = vector.broadcast %cst_27 : f32 to vector<8x32xf32>
    %97 = arith.addf %96, %95 : vector<8x32xf32>
    %98 = arith.divf %96, %97 : vector<8x32xf32>
    %99 = arith.mulf %90, %67 : vector<8x32xf32>
    %100 = arith.mulf %84, %92 : vector<8x32xf32>
    %101 = arith.addf %99, %100 : vector<8x32xf32>
    %102 = math.tanh %101 : vector<8x32xf32>
    %103 = arith.mulf %98, %102 : vector<8x32xf32>
    %104 = arith.index_cast %c2_i32 : i32 to index
    %c0_28 = arith.constant 0 : index
    %c0_29 = arith.constant 0 : index
    %105 = vector.load %arg4[%104, %c0_28, %c0_29] : memref<8x8x32xf32, #tpu.memory_space<vmem>>, vector<1x8x32xf32>
    %106 = vector.shape_cast %105 : vector<1x8x32xf32> to vector<8x32xf32>
    %107 = vector.shape_cast %103 : vector<8x32xf32> to vector<1x8x32xf32>
    tpu.vector_store %arg4[%104, %c0_28, %c0_29], %107 {strides = array<i32>} : memref<8x8x32xf32, #tpu.memory_space<vmem>>, vector<1x8x32xf32>,
    %c3_i32 = arith.constant 3 : i32
    %108 = arith.index_cast %c3_i32 : i32 to index
    %c0_30 = arith.constant 0 : index
    %c0_31 = arith.constant 0 : index
    %109 = vector.load %arg2[%108, %c0_30, %c0_31] : memref<8x8x128xf32, #tpu.memory_space<vmem>>, vector<1x8x128xf32>
    %110 = vector.shape_cast %109 : vector<1x8x128xf32> to vector<8x128xf32>
    %cst_32 = arith.constant dense<0.000000e+00> : vector<8x128xf32>
    %111 = tpu.matmul %103, %3, %cst_32 {dimension_numbers = #tpu.dot_dimension_numbers<[1], [0], [0], [1], [0, 0, 1, 1], [], []>} : vector<8x32xf32>, vector<32x128xf32>, vector<8x128xf32> -> vector<8x128xf32>
    %112 = arith.addf %110, %111 : vector<8x128xf32>
    %113 = vector.extract_strided_slice %112 {offsets = [0, 0], sizes = [8, 32], strides = [1, 1]} : vector<8x128xf32> to vector<8x32xf32>
    %114 = arith.negf %113 : vector<8x32xf32>
    %115 = math.exp %114 : vector<8x32xf32>
    %cst_33 = arith.constant 1.000000e+00 : f32
    %116 = vector.broadcast %cst_33 : f32 to vector<8x32xf32>
    %117 = arith.addf %116, %115 : vector<8x32xf32>
    %118 = arith.divf %116, %117 : vector<8x32xf32>
    %119 = vector.extract_strided_slice %112 {offsets = [0, 32], sizes = [8, 32], strides = [1, 1]} : vector<8x128xf32> to vector<8x32xf32>
    %120 = arith.negf %119 : vector<8x32xf32>
    %121 = math.exp %120 : vector<8x32xf32>
    %cst_34 = arith.constant 1.000000e+00 : f32
    %122 = vector.broadcast %cst_34 : f32 to vector<8x32xf32>
    %123 = arith.addf %122, %121 : vector<8x32xf32>
    %124 = arith.divf %122, %123 : vector<8x32xf32>
    %125 = vector.extract_strided_slice %112 {offsets = [0, 64], sizes = [8, 32], strides = [1, 1]} : vector<8x128xf32> to vector<8x32xf32>
    %126 = math.tanh %125 : vector<8x32xf32>
    %127 = vector.extract_strided_slice %112 {offsets = [0, 96], sizes = [8, 32], strides = [1, 1]} : vector<8x128xf32> to vector<8x32xf32>
    %128 = arith.negf %127 : vector<8x32xf32>
    %129 = math.exp %128 : vector<8x32xf32>
    %cst_35 = arith.constant 1.000000e+00 : f32
    %130 = vector.broadcast %cst_35 : f32 to vector<8x32xf32>
    %131 = arith.addf %130, %129 : vector<8x32xf32>
    %132 = arith.divf %130, %131 : vector<8x32xf32>
    %133 = arith.mulf %124, %101 : vector<8x32xf32>
    %134 = arith.mulf %118, %126 : vector<8x32xf32>
    %135 = arith.addf %133, %134 : vector<8x32xf32>
    %136 = math.tanh %135 : vector<8x32xf32>
    %137 = arith.mulf %132, %136 : vector<8x32xf32>
    %138 = arith.index_cast %c3_i32 : i32 to index
    %c0_36 = arith.constant 0 : index
    %c0_37 = arith.constant 0 : index
    %139 = vector.load %arg4[%138, %c0_36, %c0_37] : memref<8x8x32xf32, #tpu.memory_space<vmem>>, vector<1x8x32xf32>
    %140 = vector.shape_cast %139 : vector<1x8x32xf32> to vector<8x32xf32>
    %141 = vector.shape_cast %137 : vector<8x32xf32> to vector<1x8x32xf32>
    tpu.vector_store %arg4[%138, %c0_36, %c0_37], %141 {strides = array<i32>} : memref<8x8x32xf32, #tpu.memory_space<vmem>>, vector<1x8x32xf32>,
    %c4_i32 = arith.constant 4 : i32
    %142 = arith.index_cast %c4_i32 : i32 to index
    %c0_38 = arith.constant 0 : index
    %c0_39 = arith.constant 0 : index
    %143 = vector.load %arg2[%142, %c0_38, %c0_39] : memref<8x8x128xf32, #tpu.memory_space<vmem>>, vector<1x8x128xf32>
    %144 = vector.shape_cast %143 : vector<1x8x128xf32> to vector<8x128xf32>
    %cst_40 = arith.constant dense<0.000000e+00> : vector<8x128xf32>
    %145 = tpu.matmul %137, %3, %cst_40 {dimension_numbers = #tpu.dot_dimension_numbers<[1], [0], [0], [1], [0, 0, 1, 1], [], []>} : vector<8x32xf32>, vector<32x128xf32>, vector<8x128xf32> -> vector<8x128xf32>
    %146 = arith.addf %144, %145 : vector<8x128xf32>
    %147 = vector.extract_strided_slice %146 {offsets = [0, 0], sizes = [8, 32], strides = [1, 1]} : vector<8x128xf32> to vector<8x32xf32>
    %148 = arith.negf %147 : vector<8x32xf32>
    %149 = math.exp %148 : vector<8x32xf32>
    %cst_41 = arith.constant 1.000000e+00 : f32
    %150 = vector.broadcast %cst_41 : f32 to vector<8x32xf32>
    %151 = arith.addf %150, %149 : vector<8x32xf32>
    %152 = arith.divf %150, %151 : vector<8x32xf32>
    %153 = vector.extract_strided_slice %146 {offsets = [0, 32], sizes = [8, 32], strides = [1, 1]} : vector<8x128xf32> to vector<8x32xf32>
    %154 = arith.negf %153 : vector<8x32xf32>
    %155 = math.exp %154 : vector<8x32xf32>
    %cst_42 = arith.constant 1.000000e+00 : f32
    %156 = vector.broadcast %cst_42 : f32 to vector<8x32xf32>
    %157 = arith.addf %156, %155 : vector<8x32xf32>
    %158 = arith.divf %156, %157 : vector<8x32xf32>
    %159 = vector.extract_strided_slice %146 {offsets = [0, 64], sizes = [8, 32], strides = [1, 1]} : vector<8x128xf32> to vector<8x32xf32>
    %160 = math.tanh %159 : vector<8x32xf32>
    %161 = vector.extract_strided_slice %146 {offsets = [0, 96], sizes = [8, 32], strides = [1, 1]} : vector<8x128xf32> to vector<8x32xf32>
    %162 = arith.negf %161 : vector<8x32xf32>
    %163 = math.exp %162 : vector<8x32xf32>
    %cst_43 = arith.constant 1.000000e+00 : f32
    %164 = vector.broadcast %cst_43 : f32 to vector<8x32xf32>
    %165 = arith.addf %164, %163 : vector<8x32xf32>
    %166 = arith.divf %164, %165 : vector<8x32xf32>
    %167 = arith.mulf %158, %135 : vector<8x32xf32>
    %168 = arith.mulf %152, %160 : vector<8x32xf32>
    %169 = arith.addf %167, %168 : vector<8x32xf32>
    %170 = math.tanh %169 : vector<8x32xf32>
    %171 = arith.mulf %166, %170 : vector<8x32xf32>
    %172 = arith.index_cast %c4_i32 : i32 to index
    %c0_44 = arith.constant 0 : index
    %c0_45 = arith.constant 0 : index
    %173 = vector.load %arg4[%172, %c0_44, %c0_45] : memref<8x8x32xf32, #tpu.memory_space<vmem>>, vector<1x8x32xf32>
    %174 = vector.shape_cast %173 : vector<1x8x32xf32> to vector<8x32xf32>
    %175 = vector.shape_cast %171 : vector<8x32xf32> to vector<1x8x32xf32>
    tpu.vector_store %arg4[%172, %c0_44, %c0_45], %175 {strides = array<i32>} : memref<8x8x32xf32, #tpu.memory_space<vmem>>, vector<1x8x32xf32>,
    %c5_i32 = arith.constant 5 : i32
    %176 = arith.index_cast %c5_i32 : i32 to index
    %c0_46 = arith.constant 0 : index
    %c0_47 = arith.constant 0 : index
    %177 = vector.load %arg2[%176, %c0_46, %c0_47] : memref<8x8x128xf32, #tpu.memory_space<vmem>>, vector<1x8x128xf32>
    %178 = vector.shape_cast %177 : vector<1x8x128xf32> to vector<8x128xf32>
    %cst_48 = arith.constant dense<0.000000e+00> : vector<8x128xf32>
    %179 = tpu.matmul %171, %3, %cst_48 {dimension_numbers = #tpu.dot_dimension_numbers<[1], [0], [0], [1], [0, 0, 1, 1], [], []>} : vector<8x32xf32>, vector<32x128xf32>, vector<8x128xf32> -> vector<8x128xf32>
    %180 = arith.addf %178, %179 : vector<8x128xf32>
    %181 = vector.extract_strided_slice %180 {offsets = [0, 0], sizes = [8, 32], strides = [1, 1]} : vector<8x128xf32> to vector<8x32xf32>
    %182 = arith.negf %181 : vector<8x32xf32>
    %183 = math.exp %182 : vector<8x32xf32>
    %cst_49 = arith.constant 1.000000e+00 : f32
    %184 = vector.broadcast %cst_49 : f32 to vector<8x32xf32>
    %185 = arith.addf %184, %183 : vector<8x32xf32>
    %186 = arith.divf %184, %185 : vector<8x32xf32>
    %187 = vector.extract_strided_slice %180 {offsets = [0, 32], sizes = [8, 32], strides = [1, 1]} : vector<8x128xf32> to vector<8x32xf32>
    %188 = arith.negf %187 : vector<8x32xf32>
    %189 = math.exp %188 : vector<8x32xf32>
    %cst_50 = arith.constant 1.000000e+00 : f32
    %190 = vector.broadcast %cst_50 : f32 to vector<8x32xf32>
    %191 = arith.addf %190, %189 : vector<8x32xf32>
    %192 = arith.divf %190, %191 : vector<8x32xf32>
    %193 = vector.extract_strided_slice %180 {offsets = [0, 64], sizes = [8, 32], strides = [1, 1]} : vector<8x128xf32> to vector<8x32xf32>
    %194 = math.tanh %193 : vector<8x32xf32>
    %195 = vector.extract_strided_slice %180 {offsets = [0, 96], sizes = [8, 32], strides = [1, 1]} : vector<8x128xf32> to vector<8x32xf32>
    %196 = arith.negf %195 : vector<8x32xf32>
    %197 = math.exp %196 : vector<8x32xf32>
    %cst_51 = arith.constant 1.000000e+00 : f32
    %198 = vector.broadcast %cst_51 : f32 to vector<8x32xf32>
    %199 = arith.addf %198, %197 : vector<8x32xf32>
    %200 = arith.divf %198, %199 : vector<8x32xf32>
    %201 = arith.mulf %192, %169 : vector<8x32xf32>
    %202 = arith.mulf %186, %194 : vector<8x32xf32>
    %203 = arith.addf %201, %202 : vector<8x32xf32>
    %204 = math.tanh %203 : vector<8x32xf32>
    %205 = arith.mulf %200, %204 : vector<8x32xf32>
    %206 = arith.index_cast %c5_i32 : i32 to index
    %c0_52 = arith.constant 0 : index
    %c0_53 = arith.constant 0 : index
    %207 = vector.load %arg4[%206, %c0_52, %c0_53] : memref<8x8x32xf32, #tpu.memory_space<vmem>>, vector<1x8x32xf32>
    %208 = vector.shape_cast %207 : vector<1x8x32xf32> to vector<8x32xf32>
    %209 = vector.shape_cast %205 : vector<8x32xf32> to vector<1x8x32xf32>
    tpu.vector_store %arg4[%206, %c0_52, %c0_53], %209 {strides = array<i32>} : memref<8x8x32xf32, #tpu.memory_space<vmem>>, vector<1x8x32xf32>,
    %c6_i32 = arith.constant 6 : i32
    %210 = arith.index_cast %c6_i32 : i32 to index
    %c0_54 = arith.constant 0 : index
    %c0_55 = arith.constant 0 : index
    %211 = vector.load %arg2[%210, %c0_54, %c0_55] : memref<8x8x128xf32, #tpu.memory_space<vmem>>, vector<1x8x128xf32>
    %212 = vector.shape_cast %211 : vector<1x8x128xf32> to vector<8x128xf32>
    %cst_56 = arith.constant dense<0.000000e+00> : vector<8x128xf32>
    %213 = tpu.matmul %205, %3, %cst_56 {dimension_numbers = #tpu.dot_dimension_numbers<[1], [0], [0], [1], [0, 0, 1, 1], [], []>} : vector<8x32xf32>, vector<32x128xf32>, vector<8x128xf32> -> vector<8x128xf32>
    %214 = arith.addf %212, %213 : vector<8x128xf32>
    %215 = vector.extract_strided_slice %214 {offsets = [0, 0], sizes = [8, 32], strides = [1, 1]} : vector<8x128xf32> to vector<8x32xf32>
    %216 = arith.negf %215 : vector<8x32xf32>
    %217 = math.exp %216 : vector<8x32xf32>
    %cst_57 = arith.constant 1.000000e+00 : f32
    %218 = vector.broadcast %cst_57 : f32 to vector<8x32xf32>
    %219 = arith.addf %218, %217 : vector<8x32xf32>
    %220 = arith.divf %218, %219 : vector<8x32xf32>
    %221 = vector.extract_strided_slice %214 {offsets = [0, 32], sizes = [8, 32], strides = [1, 1]} : vector<8x128xf32> to vector<8x32xf32>
    %222 = arith.negf %221 : vector<8x32xf32>
    %223 = math.exp %222 : vector<8x32xf32>
    %cst_58 = arith.constant 1.000000e+00 : f32
    %224 = vector.broadcast %cst_58 : f32 to vector<8x32xf32>
    %225 = arith.addf %224, %223 : vector<8x32xf32>
    %226 = arith.divf %224, %225 : vector<8x32xf32>
    %227 = vector.extract_strided_slice %214 {offsets = [0, 64], sizes = [8, 32], strides = [1, 1]} : vector<8x128xf32> to vector<8x32xf32>
    %228 = math.tanh %227 : vector<8x32xf32>
    %229 = vector.extract_strided_slice %214 {offsets = [0, 96], sizes = [8, 32], strides = [1, 1]} : vector<8x128xf32> to vector<8x32xf32>
    %230 = arith.negf %229 : vector<8x32xf32>
    %231 = math.exp %230 : vector<8x32xf32>
    %cst_59 = arith.constant 1.000000e+00 : f32
    %232 = vector.broadcast %cst_59 : f32 to vector<8x32xf32>
    %233 = arith.addf %232, %231 : vector<8x32xf32>
    %234 = arith.divf %232, %233 : vector<8x32xf32>
    %235 = arith.mulf %226, %203 : vector<8x32xf32>
    %236 = arith.mulf %220, %228 : vector<8x32xf32>
    %237 = arith.addf %235, %236 : vector<8x32xf32>
    %238 = math.tanh %237 : vector<8x32xf32>
    %239 = arith.mulf %234, %238 : vector<8x32xf32>
    %240 = arith.index_cast %c6_i32 : i32 to index
    %c0_60 = arith.constant 0 : index
    %c0_61 = arith.constant 0 : index
    %241 = vector.load %arg4[%240, %c0_60, %c0_61] : memref<8x8x32xf32, #tpu.memory_space<vmem>>, vector<1x8x32xf32>
    %242 = vector.shape_cast %241 : vector<1x8x32xf32> to vector<8x32xf32>
    %243 = vector.shape_cast %239 : vector<8x32xf32> to vector<1x8x32xf32>
    tpu.vector_store %arg4[%240, %c0_60, %c0_61], %243 {strides = array<i32>} : memref<8x8x32xf32, #tpu.memory_space<vmem>>, vector<1x8x32xf32>,
    %c7_i32 = arith.constant 7 : i32
    %244 = arith.index_cast %c7_i32 : i32 to index
    %c0_62 = arith.constant 0 : index
    %c0_63 = arith.constant 0 : index
    %245 = vector.load %arg2[%244, %c0_62, %c0_63] : memref<8x8x128xf32, #tpu.memory_space<vmem>>, vector<1x8x128xf32>
    %246 = vector.shape_cast %245 : vector<1x8x128xf32> to vector<8x128xf32>
    %cst_64 = arith.constant dense<0.000000e+00> : vector<8x128xf32>
    %247 = tpu.matmul %239, %3, %cst_64 {dimension_numbers = #tpu.dot_dimension_numbers<[1], [0], [0], [1], [0, 0, 1, 1], [], []>} : vector<8x32xf32>, vector<32x128xf32>, vector<8x128xf32> -> vector<8x128xf32>
    %248 = arith.addf %246, %247 : vector<8x128xf32>
    %249 = vector.extract_strided_slice %248 {offsets = [0, 0], sizes = [8, 32], strides = [1, 1]} : vector<8x128xf32> to vector<8x32xf32>
    %250 = arith.negf %249 : vector<8x32xf32>
    %251 = math.exp %250 : vector<8x32xf32>
    %cst_65 = arith.constant 1.000000e+00 : f32
    %252 = vector.broadcast %cst_65 : f32 to vector<8x32xf32>
    %253 = arith.addf %252, %251 : vector<8x32xf32>
    %254 = arith.divf %252, %253 : vector<8x32xf32>
    %255 = vector.extract_strided_slice %248 {offsets = [0, 32], sizes = [8, 32], strides = [1, 1]} : vector<8x128xf32> to vector<8x32xf32>
    %256 = arith.negf %255 : vector<8x32xf32>
    %257 = math.exp %256 : vector<8x32xf32>
    %cst_66 = arith.constant 1.000000e+00 : f32
    %258 = vector.broadcast %cst_66 : f32 to vector<8x32xf32>
    %259 = arith.addf %258, %257 : vector<8x32xf32>
    %260 = arith.divf %258, %259 : vector<8x32xf32>
    %261 = vector.extract_strided_slice %248 {offsets = [0, 64], sizes = [8, 32], strides = [1, 1]} : vector<8x128xf32> to vector<8x32xf32>
    %262 = math.tanh %261 : vector<8x32xf32>
    %263 = vector.extract_strided_slice %248 {offsets = [0, 96], sizes = [8, 32], strides = [1, 1]} : vector<8x128xf32> to vector<8x32xf32>
    %264 = arith.negf %263 : vector<8x32xf32>
    %265 = math.exp %264 : vector<8x32xf32>
    %cst_67 = arith.constant 1.000000e+00 : f32
    %266 = vector.broadcast %cst_67 : f32 to vector<8x32xf32>
    %267 = arith.addf %266, %265 : vector<8x32xf32>
    %268 = arith.divf %266, %267 : vector<8x32xf32>
    %269 = arith.mulf %260, %237 : vector<8x32xf32>
    %270 = arith.mulf %254, %262 : vector<8x32xf32>
    %271 = arith.addf %269, %270 : vector<8x32xf32>
    %272 = math.tanh %271 : vector<8x32xf32>
    %273 = arith.mulf %268, %272 : vector<8x32xf32>
    %274 = arith.index_cast %c7_i32 : i32 to index
    %c0_68 = arith.constant 0 : index
    %c0_69 = arith.constant 0 : index
    %275 = vector.load %arg4[%274, %c0_68, %c0_69] : memref<8x8x32xf32, #tpu.memory_space<vmem>>, vector<1x8x32xf32>
    %276 = vector.shape_cast %275 : vector<1x8x32xf32> to vector<8x32xf32>
    %277 = vector.shape_cast %273 : vector<8x32xf32> to vector<1x8x32xf32>
    tpu.vector_store %arg4[%274, %c0_68, %c0_69], %277 {strides = array<i32>} : memref<8x8x32xf32, #tpu.memory_space<vmem>>, vector<1x8x32xf32>,
    %c8_i32 = arith.constant 8 : i32
    %c0_70 = arith.constant 0 : index
    %c0_71 = arith.constant 0 : index
    %278 = vector.load %arg5[%c0_70, %c0_71] : memref<8x32xf32, #tpu.memory_space<vmem>>, vector<8x32xf32>
    tpu.vector_store %arg5[%c0_70, %c0_71], %273 {strides = array<i32>} : memref<8x32xf32, #tpu.memory_space<vmem>>, vector<8x32xf32>,
    %c0_72 = arith.constant 0 : index
    %c0_73 = arith.constant 0 : index
    %279 = vector.load %arg6[%c0_72, %c0_73] : memref<8x32xf32, #tpu.memory_space<vmem>>, vector<8x32xf32>
    tpu.vector_store %arg6[%c0_72, %c0_73], %271 {strides = array<i32>} : memref<8x32xf32, #tpu.memory_space<vmem>>, vector<8x32xf32>,
    return
  }
  func.func @transform_0(%arg0: i32, %arg1: i32) -> (i32, i32, i32) {
    %c0_i32 = arith.constant 0 : i32
    %c0_i32_0 = arith.constant 0 : i32
    return %arg1, %arg0, %c0_i32 : i32, i32, i32
  }
  func.func @transform_1(%arg0: i32, %arg1: i32) -> (i32, i32) {
    %c0_i32 = arith.constant 0 : i32
    %c0_i32_0 = arith.constant 0 : i32
    %c0_i32_1 = arith.constant 0 : i32
    return %c0_i32, %c0_i32_0 : i32, i32
  }
  func.func @transform_2(%arg0: i32, %arg1: i32) -> (i32, i32, i32) {
    %c0_i32 = arith.constant 0 : i32
    %c0_i32_0 = arith.constant 0 : i32
    return %arg1, %arg0, %c0_i32 : i32, i32, i32
  }
}

</mosaic_0001>

<llo_original>
// kernel: tpu_custom_call.1
$region0: #{tpu_custom_call.1}
  #allocation0 [shape = 'u32[]', space=smem, size = 0x4, offset = 0x4, fixed_abs, tag = 'smem constant byte address 0x4 - core index']
  #allocation1 [shape = 'u32[144,128]{1,0:T(1,128)}', space=vmem, size = 0x12000, scoped, tag = 'internal scratch']
  #allocation2 [shape = 'f32[8,32]{1,0:T(8,128)}', space=vmem, size = 0x1000, scoped, tag = 'scratch operand']
  #allocation3 [shape = 'f32[8,32]{1,0:T(8,128)}', space=vmem, size = 0x1000, scoped, tag = 'scratch operand']
  %s0 = inlined_call_operand.hbm [shape: f32[8,8,128], index: 0, kind: input, shape index: {}]
  %s1 = inlined_call_operand.hbm [shape: f32[32,128], index: 1, kind: input, shape index: {}]
  %s2 = inlined_call_operand.hbm [shape: f32[8,8,32], index: 2, kind: output, shape index: {}]
  %s3 = sld [smem:[#allocation0]]
  $region30: #{tpu_custom_call.1} parent=0
    _
  %s5 = ssub.s32 1, %s3
  %s6 = scalar_select 0, %s5, %s3
  $region1: #{tpu_custom_call.1} parent=0
    #allocation4 [shape = 'u8[32768]{0}', space=vmem, size = 0x8000, scoped, tag = 'input window, operand 0, single buffered']
    #allocation5 [shape = 's32[1]{0}', space=sflag, size = 0x4, scoped, tag = 'scoped memory for tpu_custom_call.1']
    #allocation6 [shape = 's32[1]{0}', space=sflag, size = 0x4, scoped, tag = 'scoped memory for tpu_custom_call.1']
    #allocation7 [shape = 'u8[16384]{0}', space=vmem, size = 0x4000, scoped, tag = 'input window, operand 1, single buffered']
    #allocation8 [shape = 's32[1]{0}', space=sflag, size = 0x4, scoped, tag = 'scoped memory for tpu_custom_call.1']
    #allocation9 [shape = 'u8[32768]{0}', space=vmem, size = 0x8000, scoped, tag = 'output window, operand 0, single buffered']
    %7 = vsyncpa [#allocation5], 0
    %8 = vsyncpa [#allocation8], 0
    %9 = vsyncpa [#allocation6], 0
    // Predicated region
    $region2: #{tpu_custom_call.1} parent=1 // pred_check
      _
    $region3: #{tpu_custom_call.1} parent=1 // pred_check_branch
      %11 = sbr.rel (0) target = $region5
    $region4: #{tpu_custom_call.1} parent=1 // pred_region
      %s13 = ssub.s32 1024, 1024
      %14 = vsyncadd [#allocation5], %s13
      %s15 = sshll.u32 [#allocation4], 4
      %s16 = int_to_ptr.vmem [resolvable:$true] %s15
      %21 = dma.hbm_to_vmem [thread:$0]  %s0, 1024, %s16, [#allocation5], 128, 128, 8
    $region5: #{tpu_custom_call.1} parent=1 // pred_fallthru
      _
    // Predicated region
    $region6: #{tpu_custom_call.1} parent=1 // pred_check
      _
    $region7: #{tpu_custom_call.1} parent=1 // pred_check_branch
      %23 = sbr.rel (0) target = $region9
    $region8: #{tpu_custom_call.1} parent=1 // pred_region
      %s25 = ssub.s32 512, 512
      %26 = vsyncadd [#allocation8], %s25
      %s27 = sshll.u32 [#allocation7], 4
      %s28 = int_to_ptr.vmem [resolvable:$true] %s27
      %33 = dma.hbm_to_vmem [thread:$0]  %s1, 512, %s28, [#allocation8], 128, 128, 8
    $region9: #{tpu_custom_call.1} parent=1 // pred_fallthru
      _
    // Predicated region
    $region10: #{tpu_custom_call.1} parent=1 // pred_check
      _
    $region11: #{tpu_custom_call.1} parent=1 // pred_check_branch
      %35 = sbr.rel (0) target = $region13
    $region12: #{tpu_custom_call.1} parent=1 // pred_region
      %36 = dma.done [#allocation5], 1024
    $region13: #{tpu_custom_call.1} parent=1 // pred_fallthru
      _
    // Predicated region
    $region14: #{tpu_custom_call.1} parent=1 // pred_check
      _
    $region15: #{tpu_custom_call.1} parent=1 // pred_check_branch
      %38 = sbr.rel (0) target = $region17
    $region16: #{tpu_custom_call.1} parent=1 // pred_region
      %39 = dma.done [#allocation8], 512
    $region17: #{tpu_custom_call.1} parent=1 // pred_fallthru
      _
    %p40 = scmp.eq.s32.totalorder 0, 0
    // Predicated region
    $region18: #{tpu_custom_call.1} parent=1 // pred_check
      %p41 = pneg %p40
    $region19: #{tpu_custom_call.1} parent=1 // pred_check_branch
      %43 = sbr.rel (%p41) target = $region21
    $region20: #{tpu_custom_call.1} parent=1 // pred_region
      %vm44 = vcmask 261120
      %45 = vst.msk [vmem:[#allocation2] sm:$0xff] %vm44, 0.0
      %46 = vst.msk [vmem:[#allocation3] sm:$0xff] %vm44, 0.0
    $region21: #{tpu_custom_call.1} parent=1 // pred_fallthru
      _
    %v47 = vld [vmem:[#allocation7] sm:$0xff]
    %v48 = vld [vmem:[#allocation7 + $0x8] sm:$0xff]
    %v49 = vld [vmem:[#allocation7 + $0x10] sm:$0xff]
    %v50 = vld [vmem:[#allocation7 + $0x18] sm:$0xff]
    %v51 = vld [vmem:[#allocation2] sm:$0xff]
    %v52 = vld [vmem:[#allocation3] sm:$0xff]
    %v53 = vld [vmem:[#allocation4] sm:$0xff]
    %vm54 = vcmask 261120
    %v56 = vsel %vm54, %v51, 0
    %58 = vmatprep.subr.mxu0 0.0
    %59 = vmatpush1.msra.mxu0 %v47
    %60 = vmatprep.subr.mxu0 0.0
    %61 = vmatpush1.msra.mxu0 %v48
    %62 = vmatprep.subr.mxu0 0.0
    %63 = vmatpush1.msra.mxu0 %v49
    %64 = vmatprep.subr.mxu0 0.0
    %65 = vmatpush1.msra.mxu0 %v50
    %66 = vmatprep.subr.mxu0 0.0
    %67 = vmatpush1.msra.mxu0 0.0
    %68 = vmatprep.subr.mxu0 0.0
    %69 = vmatpush1.msra.mxu0 0.0
    %70 = vmatprep.subr.mxu0 0.0
    %71 = vmatpush1.msra.mxu0 0.0
    %72 = vmatprep.subr.mxu0 0.0
    %73 = vmatpush1.msra.mxu0 0.0
    %74 = vmatprep.subr.mxu0 0.0
    %75 = vmatpush1.msra.mxu0 0.0
    %76 = vmatprep.subr.mxu0 0.0
    %77 = vmatpush1.msra.mxu0 0.0
    %78 = vmatprep.subr.mxu0 0.0
    %79 = vmatpush1.msra.mxu0 0.0
    %80 = vmatprep.subr.mxu0 0.0
    %81 = vmatpush1.msra.mxu0 0.0
    %82 = vmatprep.subr.mxu0 0.0
    %83 = vmatpush1.msra.mxu0 0.0
    %84 = vmatprep.subr.mxu0 0.0
    %85 = vmatpush1.msra.mxu0 0.0
    %86 = vmatprep.subr.mxu0 0.0
    %87 = vmatpush1.msra.mxu0 0.0
    %88 = vmatprep.subr.mxu0 0.0
    %89 = vmatpush1.msra.mxu0 0.0
    %90 = vmatprep.subr.mxu0 0.0
    %91 = vmatpush1.msra.mxu0 0.0
    %92 = vmatprep.subr.mxu0 0.0
    %93 = vmatpush1.msra.mxu0 0.0
    %94 = vmatprep.subr.mxu0 0.0
    %95 = vmatpush1.msra.mxu0 0.0
    %96 = vmatprep.subr.mxu0 0.0
    %97 = vmatpush1.msra.mxu0 0.0
    %98 = vmatprep.subr.mxu0 0.0
    %99 = vmatpush1.msra.mxu0 0.0
    %100 = vmatprep.subr.mxu0 0.0
    %101 = vmatpush1.msra.mxu0 0.0
    %102 = vmatprep.subr.mxu0 0.0
    %103 = vmatpush1.msra.mxu0 0.0
    %104 = vmatprep.subr.mxu0 0.0
    %105 = vmatpush1.msra.mxu0 0.0
    %106 = vmatprep.subr.mxu0 0.0
    %107 = vmatpush1.msra.mxu0 0.0
    %108 = vmatprep.subr.mxu0 0.0
    %109 = vmatpush1.msra.mxu0 0.0
    %110 = vmatprep.subr.mxu0 0.0
    %111 = vmatpush1.msra.mxu0 0.0
    %112 = vmatprep.subr.mxu0 0.0
    %113 = vmatpush1.msra.mxu0 0.0
    %114 = vmatprep.subr.mxu0 0.0
    %115 = vmatpush1.msra.mxu0 0.0
    %116 = vmatprep.subr.mxu0 0.0
    %117 = vmatpush1.msra.mxu0 0.0
    %118 = vmatprep.subr.mxu0 0.0
    %119 = vmatpush1.msra.mxu0 0.0
    %120 = vmatprep.subr.mxu0 0.0
    %121 = vmatpush1.msra.mxu0 0.0
    %122 = vmatprep.mubr.f32.mxu0 0.0
    %123 = vmatmul.mubr.f32.gmra.mrb[0].mxu0 %v56
    %v124 = vpop.f32.mrb[0].mxu0
    %v125 = vadd.f32 0.0, %v124
    %v126 = vpop.f32.mrb[0].mxu0
    %127 = vdwg.mxu0
    %v128 = vadd.f32 %v53, %v125
    %v129 = vxor.u32 %v128, 2147483648
    %v130 = vmul.f32 %v129, 1.442695
    %v131 = vpow.pop %v130
    %v132 = vadd.f32 %v131, 1.0
    %v133 = vrcp.pop %v132
    %v134 = vmul.f32 1.0, %v133
    %v135 = vtanh.pop %v128
    %137 = vrot.lane.b32.xlu0 %v52, 32
    %v138 = vpop.permute.xlu0 %137
    %v140 = vmul.f32 %v134, %v138
    %142 = vrot.lane.b32.xlu0 %v135, 64
    %v143 = vpop.permute.xlu0 %142
    %v145 = vmul.f32 %v134, %v143
    %147 = vrot.lane.b32.xlu0 %v145, 32
    %v148 = vpop.permute.xlu0 %147
    %v150 = vadd.f32 %v140, %v148
    %v151 = vtanh.pop %v150
    %153 = vrot.lane.b32.xlu0 %v151, 64
    %v154 = vpop.permute.xlu0 %153
    %v156 = vmul.f32 %v134, %v154
    %158 = vrot.lane.b32.xlu0 %v156, 32
    %v159 = vpop.permute.xlu0 %158
    %161 = vst.msk [vmem:[#allocation9] sm:$0xff] %vm54, %v159
    %s162 = scalar_lea.vmem [#allocation4], 8
    %v163 = vld [vmem:[%s162] sm:$0xff]
    %v164 = vsel %vm54, %v159, 0
    %166 = vmatprep.subr.mxu0 0.0
    %167 = vmatpush1.msra.mxu0 %v47
    %168 = vmatprep.subr.mxu0 0.0
    %169 = vmatpush1.msra.mxu0 %v48
    %170 = vmatprep.subr.mxu0 0.0
    %171 = vmatpush1.msra.mxu0 %v49
    %172 = vmatprep.subr.mxu0 0.0
    %173 = vmatpush1.msra.mxu0 %v50
    %174 = vmatprep.subr.mxu0 0.0
    %175 = vmatpush1.msra.mxu0 0.0
    %176 = vmatprep.subr.mxu0 0.0
    %177 = vmatpush1.msra.mxu0 0.0
    %178 = vmatprep.subr.mxu0 0.0
    %179 = vmatpush1.msra.mxu0 0.0
    %180 = vmatprep.subr.mxu0 0.0
    %181 = vmatpush1.msra.mxu0 0.0
    %182 = vmatprep.subr.mxu0 0.0
    %183 = vmatpush1.msra.mxu0 0.0
    %184 = vmatprep.subr.mxu0 0.0
    %185 = vmatpush1.msra.mxu0 0.0
    %186 = vmatprep.subr.mxu0 0.0
    %187 = vmatpush1.msra.mxu0 0.0
    %188 = vmatprep.subr.mxu0 0.0
    %189 = vmatpush1.msra.mxu0 0.0
    %190 = vmatprep.subr.mxu0 0.0
    %191 = vmatpush1.msra.mxu0 0.0
    %192 = vmatprep.subr.mxu0 0.0
    %193 = vmatpush1.msra.mxu0 0.0
    %194 = vmatprep.subr.mxu0 0.0
    %195 = vmatpush1.msra.mxu0 0.0
    %196 = vmatprep.subr.mxu0 0.0
    %197 = vmatpush1.msra.mxu0 0.0
    %198 = vmatprep.subr.mxu0 0.0
    %199 = vmatpush1.msra.mxu0 0.0
    %200 = vmatprep.subr.mxu0 0.0
    %201 = vmatpush1.msra.mxu0 0.0
    %202 = vmatprep.subr.mxu0 0.0
    %203 = vmatpush1.msra.mxu0 0.0
    %204 = vmatprep.subr.mxu0 0.0
    %205 = vmatpush1.msra.mxu0 0.0
    %206 = vmatprep.subr.mxu0 0.0
    %207 = vmatpush1.msra.mxu0 0.0
    %208 = vmatprep.subr.mxu0 0.0
    %209 = vmatpush1.msra.mxu0 0.0
    %210 = vmatprep.subr.mxu0 0.0
    %211 = vmatpush1.msra.mxu0 0.0
    %212 = vmatprep.subr.mxu0 0.0
    %213 = vmatpush1.msra.mxu0 0.0
    %214 = vmatprep.subr.mxu0 0.0
    %215 = vmatpush1.msra.mxu0 0.0
    %216 = vmatprep.subr.mxu0 0.0
    %217 = vmatpush1.msra.mxu0 0.0
    %218 = vmatprep.subr.mxu0 0.0
    %219 = vmatpush1.msra.mxu0 0.0
    %220 = vmatprep.subr.mxu0 0.0
    %221 = vmatpush1.msra.mxu0 0.0
    %222 = vmatprep.subr.mxu0 0.0
    %223 = vmatpush1.msra.mxu0 0.0
    %224 = vmatprep.subr.mxu0 0.0
    %225 = vmatpush1.msra.mxu0 0.0
    %226 = vmatprep.subr.mxu0 0.0
    %227 = vmatpush1.msra.mxu0 0.0
    %228 = vmatprep.subr.mxu0 0.0
    %229 = vmatpush1.msra.mxu0 0.0
    %230 = vmatprep.mubr.f32.mxu0 0.0
    %231 = vmatmul.mubr.f32.gmra.mrb[0].mxu0 %v164
    %v232 = vpop.f32.mrb[0].mxu0
    %v233 = vadd.f32 0.0, %v232
    %v234 = vpop.f32.mrb[0].mxu0
    %235 = vdwg.mxu0
    %v236 = vadd.f32 %v163, %v233
    %v237 = vxor.u32 %v236, 2147483648
    %v238 = vmul.f32 %v237, 1.442695
    %v239 = vpow.pop %v238
    %v240 = vadd.f32 %v239, 1.0
    %v241 = vrcp.pop %v240
    %v242 = vmul.f32 1.0, %v241
    %v243 = vtanh.pop %v236
    %v244 = vmul.f32 %v242, %v150
    %246 = vrot.lane.b32.xlu0 %v243, 64
    %v247 = vpop.permute.xlu0 %246
    %v249 = vmul.f32 %v242, %v247
    %251 = vrot.lane.b32.xlu0 %v249, 32
    %v252 = vpop.permute.xlu0 %251
    %v254 = vadd.f32 %v244, %v252
    %v255 = vtanh.pop %v254
    %257 = vrot.lane.b32.xlu0 %v255, 64
    %v258 = vpop.permute.xlu0 %257
    %v260 = vmul.f32 %v242, %v258
    %262 = vrot.lane.b32.xlu0 %v260, 32
    %v263 = vpop.permute.xlu0 %262
    %s265 = scalar_lea.vmem [#allocation9], 8
    %266 = vst.msk [vmem:[%s265] sm:$0xff] %vm54, %v263
    %s267 = scalar_lea.vmem [#allocation4], 16
    %v268 = vld [vmem:[%s267] sm:$0xff]
    %v269 = vsel %vm54, %v263, 0
    %271 = vmatprep.subr.mxu0 0.0
    %272 = vmatpush1.msra.mxu0 %v47
    %273 = vmatprep.subr.mxu0 0.0
    %274 = vmatpush1.msra.mxu0 %v48
    %275 = vmatprep.subr.mxu0 0.0
    %276 = vmatpush1.msra.mxu0 %v49
    %277 = vmatprep.subr.mxu0 0.0
    %278 = vmatpush1.msra.mxu0 %v50
    %279 = vmatprep.subr.mxu0 0.0
    %280 = vmatpush1.msra.mxu0 0.0
    %281 = vmatprep.subr.mxu0 0.0
    %282 = vmatpush1.msra.mxu0 0.0
    %283 = vmatprep.subr.mxu0 0.0
    %284 = vmatpush1.msra.mxu0 0.0
    %285 = vmatprep.subr.mxu0 0.0
    %286 = vmatpush1.msra.mxu0 0.0
    %287 = vmatprep.subr.mxu0 0.0
    %288 = vmatpush1.msra.mxu0 0.0
    %289 = vmatprep.subr.mxu0 0.0
    %290 = vmatpush1.msra.mxu0 0.0
    %291 = vmatprep.subr.mxu0 0.0
    %292 = vmatpush1.msra.mxu0 0.0
    %293 = vmatprep.subr.mxu0 0.0
    %294 = vmatpush1.msra.mxu0 0.0
    %295 = vmatprep.subr.mxu0 0.0
    %296 = vmatpush1.msra.mxu0 0.0
    %297 = vmatprep.subr.mxu0 0.0
    %298 = vmatpush1.msra.mxu0 0.0
    %299 = vmatprep.subr.mxu0 0.0
    %300 = vmatpush1.msra.mxu0 0.0
    %301 = vmatprep.subr.mxu0 0.0
    %302 = vmatpush1.msra.mxu0 0.0
    %303 = vmatprep.subr.mxu0 0.0
    %304 = vmatpush1.msra.mxu0 0.0
    %305 = vmatprep.subr.mxu0 0.0
    %306 = vmatpush1.msra.mxu0 0.0
    %307 = vmatprep.subr.mxu0 0.0
    %308 = vmatpush1.msra.mxu0 0.0
    %309 = vmatprep.subr.mxu0 0.0
    %310 = vmatpush1.msra.mxu0 0.0
    %311 = vmatprep.subr.mxu0 0.0
    %312 = vmatpush1.msra.mxu0 0.0
    %313 = vmatprep.subr.mxu0 0.0
    %314 = vmatpush1.msra.mxu0 0.0
    %315 = vmatprep.subr.mxu0 0.0
    %316 = vmatpush1.msra.mxu0 0.0
    %317 = vmatprep.subr.mxu0 0.0
    %318 = vmatpush1.msra.mxu0 0.0
    %319 = vmatprep.subr.mxu0 0.0
    %320 = vmatpush1.msra.mxu0 0.0
    %321 = vmatprep.subr.mxu0 0.0
    %322 = vmatpush1.msra.mxu0 0.0
    %323 = vmatprep.subr.mxu0 0.0
    %324 = vmatpush1.msra.mxu0 0.0
    %325 = vmatprep.subr.mxu0 0.0
    %326 = vmatpush1.msra.mxu0 0.0
    %327 = vmatprep.subr.mxu0 0.0
    %328 = vmatpush1.msra.mxu0 0.0
    %329 = vmatprep.subr.mxu0 0.0
    %330 = vmatpush1.msra.mxu0 0.0
    %331 = vmatprep.subr.mxu0 0.0
    %332 = vmatpush1.msra.mxu0 0.0
    %333 = vmatprep.subr.mxu0 0.0
    %334 = vmatpush1.msra.mxu0 0.0
    %335 = vmatprep.mubr.f32.mxu0 0.0
    %336 = vmatmul.mubr.f32.gmra.mrb[0].mxu0 %v269
    %v337 = vpop.f32.mrb[0].mxu0
    %v338 = vadd.f32 0.0, %v337
    %v339 = vpop.f32.mrb[0].mxu0
    %340 = vdwg.mxu0
    %v341 = vadd.f32 %v268, %v338
    %v342 = vxor.u32 %v341, 2147483648
    %v343 = vmul.f32 %v342, 1.442695
    %v344 = vpow.pop %v343
    %v345 = vadd.f32 %v344, 1.0
    %v346 = vrcp.pop %v345
    %v347 = vmul.f32 1.0, %v346
    %v348 = vtanh.pop %v341
    %v349 = vmul.f32 %v347, %v254
    %351 = vrot.lane.b32.xlu0 %v348, 64
    %v352 = vpop.permute.xlu0 %351
    %v354 = vmul.f32 %v347, %v352
    %356 = vrot.lane.b32.xlu0 %v354, 32
    %v357 = vpop.permute.xlu0 %356
    %v359 = vadd.f32 %v349, %v357
    %v360 = vtanh.pop %v359
    %362 = vrot.lane.b32.xlu0 %v360, 64
    %v363 = vpop.permute.xlu0 %362
    %v365 = vmul.f32 %v347, %v363
    %367 = vrot.lane.b32.xlu0 %v365, 32
    %v368 = vpop.permute.xlu0 %367
    %s370 = scalar_lea.vmem [#allocation9], 16
    %371 = vst.msk [vmem:[%s370] sm:$0xff] %vm54, %v368
    %s372 = scalar_lea.vmem [#allocation4], 24
    %v373 = vld [vmem:[%s372] sm:$0xff]
    %v374 = vsel %vm54, %v368, 0
    %376 = vmatprep.subr.mxu0 0.0
    %377 = vmatpush1.msra.mxu0 %v47
    %378 = vmatprep.subr.mxu0 0.0
    %379 = vmatpush1.msra.mxu0 %v48
    %380 = vmatprep.subr.mxu0 0.0
    %381 = vmatpush1.msra.mxu0 %v49
    %382 = vmatprep.subr.mxu0 0.0
    %383 = vmatpush1.msra.mxu0 %v50
    %384 = vmatprep.subr.mxu0 0.0
    %385 = vmatpush1.msra.mxu0 0.0
    %386 = vmatprep.subr.mxu0 0.0
    %387 = vmatpush1.msra.mxu0 0.0
    %388 = vmatprep.subr.mxu0 0.0
    %389 = vmatpush1.msra.mxu0 0.0
    %390 = vmatprep.subr.mxu0 0.0
    %391 = vmatpush1.msra.mxu0 0.0
    %392 = vmatprep.subr.mxu0 0.0
    %393 = vmatpush1.msra.mxu0 0.0
    %394 = vmatprep.subr.mxu0 0.0
    %395 = vmatpush1.msra.mxu0 0.0
    %396 = vmatprep.subr.mxu0 0.0
    %397 = vmatpush1.msra.mxu0 0.0
    %398 = vmatprep.subr.mxu0 0.0
    %399 = vmatpush1.msra.mxu0 0.0
    %400 = vmatprep.subr.mxu0 0.0
    %401 = vmatpush1.msra.mxu0 0.0
    %402 = vmatprep.subr.mxu0 0.0
    %403 = vmatpush1.msra.mxu0 0.0
    %404 = vmatprep.subr.mxu0 0.0
    %405 = vmatpush1.msra.mxu0 0.0
    %406 = vmatprep.subr.mxu0 0.0
    %407 = vmatpush1.msra.mxu0 0.0
    %408 = vmatprep.subr.mxu0 0.0
    %409 = vmatpush1.msra.mxu0 0.0
    %410 = vmatprep.subr.mxu0 0.0
    %411 = vmatpush1.msra.mxu0 0.0
    %412 = vmatprep.subr.mxu0 0.0
    %413 = vmatpush1.msra.mxu0 0.0
    %414 = vmatprep.subr.mxu0 0.0
    %415 = vmatpush1.msra.mxu0 0.0
    %416 = vmatprep.subr.mxu0 0.0
    %417 = vmatpush1.msra.mxu0 0.0
    %418 = vmatprep.subr.mxu0 0.0
    %419 = vmatpush1.msra.mxu0 0.0
    %420 = vmatprep.subr.mxu0 0.0
    %421 = vmatpush1.msra.mxu0 0.0
    %422 = vmatprep.subr.mxu0 0.0
    %423 = vmatpush1.msra.mxu0 0.0
    %424 = vmatprep.subr.mxu0 0.0
    %425 = vmatpush1.msra.mxu0 0.0
    %426 = vmatprep.subr.mxu0 0.0
    %427 = vmatpush1.msra.mxu0 0.0
    %428 = vmatprep.subr.mxu0 0.0
    %429 = vmatpush1.msra.mxu0 0.0
    %430 = vmatprep.subr.mxu0 0.0
    %431 = vmatpush1.msra.mxu0 0.0
    %432 = vmatprep.subr.mxu0 0.0
    %433 = vmatpush1.msra.mxu0 0.0
    %434 = vmatprep.subr.mxu0 0.0
    %435 = vmatpush1.msra.mxu0 0.0
    %436 = vmatprep.subr.mxu0 0.0
    %437 = vmatpush1.msra.mxu0 0.0
    %438 = vmatprep.subr.mxu0 0.0
    %439 = vmatpush1.msra.mxu0 0.0
    %440 = vmatprep.mubr.f32.mxu0 0.0
    %441 = vmatmul.mubr.f32.gmra.mrb[0].mxu0 %v374
    %v442 = vpop.f32.mrb[0].mxu0
    %v443 = vadd.f32 0.0, %v442
    %v444 = vpop.f32.mrb[0].mxu0
    %445 = vdwg.mxu0
    %v446 = vadd.f32 %v373, %v443
    %v447 = vxor.u32 %v446, 2147483648
    %v448 = vmul.f32 %v447, 1.442695
    %v449 = vpow.pop %v448
    %v450 = vadd.f32 %v449, 1.0
    %v451 = vrcp.pop %v450
    %v452 = vmul.f32 1.0, %v451
    %v453 = vtanh.pop %v446
    %v454 = vmul.f32 %v452, %v359
    %456 = vrot.lane.b32.xlu0 %v453, 64
    %v457 = vpop.permute.xlu0 %456
    %v459 = vmul.f32 %v452, %v457
    %461 = vrot.lane.b32.xlu0 %v459, 32
    %v462 = vpop.permute.xlu0 %461
    %v464 = vadd.f32 %v454, %v462
    %v465 = vtanh.pop %v464
    %467 = vrot.lane.b32.xlu0 %v465, 64
    %v468 = vpop.permute.xlu0 %467
    %v470 = vmul.f32 %v452, %v468
    %472 = vrot.lane.b32.xlu0 %v470, 32
    %v473 = vpop.permute.xlu0 %472
    %s475 = scalar_lea.vmem [#allocation9], 24
    %476 = vst.msk [vmem:[%s475] sm:$0xff] %vm54, %v473
    %s477 = scalar_lea.vmem [#allocation4], 32
    %v478 = vld [vmem:[%s477] sm:$0xff]
    %v479 = vsel %vm54, %v473, 0
    %481 = vmatprep.subr.mxu0 0.0
    %482 = vmatpush1.msra.mxu0 %v47
    %483 = vmatprep.subr.mxu0 0.0
    %484 = vmatpush1.msra.mxu0 %v48
    %485 = vmatprep.subr.mxu0 0.0
    %486 = vmatpush1.msra.mxu0 %v49
    %487 = vmatprep.subr.mxu0 0.0
    %488 = vmatpush1.msra.mxu0 %v50
    %489 = vmatprep.subr.mxu0 0.0
    %490 = vmatpush1.msra.mxu0 0.0
    %491 = vmatprep.subr.mxu0 0.0
    %492 = vmatpush1.msra.mxu0 0.0
    %493 = vmatprep.subr.mxu0 0.0
    %494 = vmatpush1.msra.mxu0 0.0
    %495 = vmatprep.subr.mxu0 0.0
    %496 = vmatpush1.msra.mxu0 0.0
    %497 = vmatprep.subr.mxu0 0.0
    %498 = vmatpush1.msra.mxu0 0.0
    %499 = vmatprep.subr.mxu0 0.0
    %500 = vmatpush1.msra.mxu0 0.0
    %501 = vmatprep.subr.mxu0 0.0
    %502 = vmatpush1.msra.mxu0 0.0
    %503 = vmatprep.subr.mxu0 0.0
    %504 = vmatpush1.msra.mxu0 0.0
    %505 = vmatprep.subr.mxu0 0.0
    %506 = vmatpush1.msra.mxu0 0.0
    %507 = vmatprep.subr.mxu0 0.0
    %508 = vmatpush1.msra.mxu0 0.0
    %509 = vmatprep.subr.mxu0 0.0
    %510 = vmatpush1.msra.mxu0 0.0
    %511 = vmatprep.subr.mxu0 0.0
    %512 = vmatpush1.msra.mxu0 0.0
    %513 = vmatprep.subr.mxu0 0.0
    %514 = vmatpush1.msra.mxu0 0.0
    %515 = vmatprep.subr.mxu0 0.0
    %516 = vmatpush1.msra.mxu0 0.0
    %517 = vmatprep.subr.mxu0 0.0
    %518 = vmatpush1.msra.mxu0 0.0
    %519 = vmatprep.subr.mxu0 0.0
    %520 = vmatpush1.msra.mxu0 0.0
    %521 = vmatprep.subr.mxu0 0.0
    %522 = vmatpush1.msra.mxu0 0.0
    %523 = vmatprep.subr.mxu0 0.0
    %524 = vmatpush1.msra.mxu0 0.0
    %525 = vmatprep.subr.mxu0 0.0
    %526 = vmatpush1.msra.mxu0 0.0
    %527 = vmatprep.subr.mxu0 0.0
    %528 = vmatpush1.msra.mxu0 0.0
    %529 = vmatprep.subr.mxu0 0.0
    %530 = vmatpush1.msra.mxu0 0.0
    %531 = vmatprep.subr.mxu0 0.0
    %532 = vmatpush1.msra.mxu0 0.0
    %533 = vmatprep.subr.mxu0 0.0
    %534 = vmatpush1.msra.mxu0 0.0
    %535 = vmatprep.subr.mxu0 0.0
    %536 = vmatpush1.msra.mxu0 0.0
    %537 = vmatprep.subr.mxu0 0.0
    %538 = vmatpush1.msra.mxu0 0.0
    %539 = vmatprep.subr.mxu0 0.0
    %540 = vmatpush1.msra.mxu0 0.0
    %541 = vmatprep.subr.mxu0 0.0
    %542 = vmatpush1.msra.mxu0 0.0
    %543 = vmatprep.subr.mxu0 0.0
    %544 = vmatpush1.msra.mxu0 0.0
    %545 = vmatprep.mubr.f32.mxu0 0.0
    %546 = vmatmul.mubr.f32.gmra.mrb[0].mxu0 %v479
    %v547 = vpop.f32.mrb[0].mxu0
    %v548 = vadd.f32 0.0, %v547
    %v549 = vpop.f32.mrb[0].mxu0
    %550 = vdwg.mxu0
    %v551 = vadd.f32 %v478, %v548
    %v552 = vxor.u32 %v551, 2147483648
    %v553 = vmul.f32 %v552, 1.442695
    %v554 = vpow.pop %v553
    %v555 = vadd.f32 %v554, 1.0
    %v556 = vrcp.pop %v555
    %v557 = vmul.f32 1.0, %v556
    %v558 = vtanh.pop %v551
    %v559 = vmul.f32 %v557, %v464
    %561 = vrot.lane.b32.xlu0 %v558, 64
    %v562 = vpop.permute.xlu0 %561
    %v564 = vmul.f32 %v557, %v562
    %566 = vrot.lane.b32.xlu0 %v564, 32
    %v567 = vpop.permute.xlu0 %566
    %v569 = vadd.f32 %v559, %v567
    %v570 = vtanh.pop %v569
    %572 = vrot.lane.b32.xlu0 %v570, 64
    %v573 = vpop.permute.xlu0 %572
    %v575 = vmul.f32 %v557, %v573
    %577 = vrot.lane.b32.xlu0 %v575, 32
    %v578 = vpop.permute.xlu0 %577
    %s580 = scalar_lea.vmem [#allocation9], 32
    %581 = vst.msk [vmem:[%s580] sm:$0xff] %vm54, %v578
    %s582 = scalar_lea.vmem [#allocation4], 40
    %v583 = vld [vmem:[%s582] sm:$0xff]
    %v584 = vsel %vm54, %v578, 0
    %586 = vmatprep.subr.mxu0 0.0
    %587 = vmatpush1.msra.mxu0 %v47
    %588 = vmatprep.subr.mxu0 0.0
    %589 = vmatpush1.msra.mxu0 %v48
    %590 = vmatprep.subr.mxu0 0.0
    %591 = vmatpush1.msra.mxu0 %v49
    %592 = vmatprep.subr.mxu0 0.0
    %593 = vmatpush1.msra.mxu0 %v50
    %594 = vmatprep.subr.mxu0 0.0
    %595 = vmatpush1.msra.mxu0 0.0
    %596 = vmatprep.subr.mxu0 0.0
    %597 = vmatpush1.msra.mxu0 0.0
    %598 = vmatprep.subr.mxu0 0.0
    %599 = vmatpush1.msra.mxu0 0.0
    %600 = vmatprep.subr.mxu0 0.0
    %601 = vmatpush1.msra.mxu0 0.0
    %602 = vmatprep.subr.mxu0 0.0
    %603 = vmatpush1.msra.mxu0 0.0
    %604 = vmatprep.subr.mxu0 0.0
    %605 = vmatpush1.msra.mxu0 0.0
    %606 = vmatprep.subr.mxu0 0.0
    %607 = vmatpush1.msra.mxu0 0.0
    %608 = vmatprep.subr.mxu0 0.0
    %609 = vmatpush1.msra.mxu0 0.0
    %610 = vmatprep.subr.mxu0 0.0
    %611 = vmatpush1.msra.mxu0 0.0
    %612 = vmatprep.subr.mxu0 0.0
    %613 = vmatpush1.msra.mxu0 0.0
    %614 = vmatprep.subr.mxu0 0.0
    %615 = vmatpush1.msra.mxu0 0.0
    %616 = vmatprep.subr.mxu0 0.0
    %617 = vmatpush1.msra.mxu0 0.0
    %618 = vmatprep.subr.mxu0 0.0
    %619 = vmatpush1.msra.mxu0 0.0
    %620 = vmatprep.subr.mxu0 0.0
    %621 = vmatpush1.msra.mxu0 0.0
    %622 = vmatprep.subr.mxu0 0.0
    %623 = vmatpush1.msra.mxu0 0.0
    %624 = vmatprep.subr.mxu0 0.0
    %625 = vmatpush1.msra.mxu0 0.0
    %626 = vmatprep.subr.mxu0 0.0
    %627 = vmatpush1.msra.mxu0 0.0
    %628 = vmatprep.subr.mxu0 0.0
    %629 = vmatpush1.msra.mxu0 0.0
    %630 = vmatprep.subr.mxu0 0.0
    %631 = vmatpush1.msra.mxu0 0.0
    %632 = vmatprep.subr.mxu0 0.0
    %633 = vmatpush1.msra.mxu0 0.0
    %634 = vmatprep.subr.mxu0 0.0
    %635 = vmatpush1.msra.mxu0 0.0
    %636 = vmatprep.subr.mxu0 0.0
    %637 = vmatpush1.msra.mxu0 0.0
    %638 = vmatprep.subr.mxu0 0.0
    %639 = vmatpush1.msra.mxu0 0.0
    %640 = vmatprep.subr.mxu0 0.0
    %641 = vmatpush1.msra.mxu0 0.0
    %642 = vmatprep.subr.mxu0 0.0
    %643 = vmatpush1.msra.mxu0 0.0
    %644 = vmatprep.subr.mxu0 0.0
    %645 = vmatpush1.msra.mxu0 0.0
    %646 = vmatprep.subr.mxu0 0.0
    %647 = vmatpush1.msra.mxu0 0.0
    %648 = vmatprep.subr.mxu0 0.0
    %649 = vmatpush1.msra.mxu0 0.0
    %650 = vmatprep.mubr.f32.mxu0 0.0
    %651 = vmatmul.mubr.f32.gmra.mrb[0].mxu0 %v584
    %v652 = vpop.f32.mrb[0].mxu0
    %v653 = vadd.f32 0.0, %v652
    %v654 = vpop.f32.mrb[0].mxu0
    %655 = vdwg.mxu0
    %v656 = vadd.f32 %v583, %v653
    %v657 = vxor.u32 %v656, 2147483648
    %v658 = vmul.f32 %v657, 1.442695
    %v659 = vpow.pop %v658
    %v660 = vadd.f32 %v659, 1.0
    %v661 = vrcp.pop %v660
    %v662 = vmul.f32 1.0, %v661
    %v663 = vtanh.pop %v656
    %v664 = vmul.f32 %v662, %v569
    %666 = vrot.lane.b32.xlu0 %v663, 64
    %v667 = vpop.permute.xlu0 %666
    %v669 = vmul.f32 %v662, %v667
    %671 = vrot.lane.b32.xlu0 %v669, 32
    %v672 = vpop.permute.xlu0 %671
    %v674 = vadd.f32 %v664, %v672
    %v675 = vtanh.pop %v674
    %677 = vrot.lane.b32.xlu0 %v675, 64
    %v678 = vpop.permute.xlu0 %677
    %v680 = vmul.f32 %v662, %v678
    %682 = vrot.lane.b32.xlu0 %v680, 32
    %v683 = vpop.permute.xlu0 %682
    %s685 = scalar_lea.vmem [#allocation9], 40
    %686 = vst.msk [vmem:[%s685] sm:$0xff] %vm54, %v683
    %s687 = scalar_lea.vmem [#allocation4], 48
    %v688 = vld [vmem:[%s687] sm:$0xff]
    %v689 = vsel %vm54, %v683, 0
    %691 = vmatprep.subr.mxu0 0.0
    %692 = vmatpush1.msra.mxu0 %v47
    %693 = vmatprep.subr.mxu0 0.0
    %694 = vmatpush1.msra.mxu0 %v48
    %695 = vmatprep.subr.mxu0 0.0
    %696 = vmatpush1.msra.mxu0 %v49
    %697 = vmatprep.subr.mxu0 0.0
    %698 = vmatpush1.msra.mxu0 %v50
    %699 = vmatprep.subr.mxu0 0.0
    %700 = vmatpush1.msra.mxu0 0.0
    %701 = vmatprep.subr.mxu0 0.0
    %702 = vmatpush1.msra.mxu0 0.0
    %703 = vmatprep.subr.mxu0 0.0
    %704 = vmatpush1.msra.mxu0 0.0
    %705 = vmatprep.subr.mxu0 0.0
    %706 = vmatpush1.msra.mxu0 0.0
    %707 = vmatprep.subr.mxu0 0.0
    %708 = vmatpush1.msra.mxu0 0.0
    %709 = vmatprep.subr.mxu0 0.0
    %710 = vmatpush1.msra.mxu0 0.0
    %711 = vmatprep.subr.mxu0 0.0
    %712 = vmatpush1.msra.mxu0 0.0
    %713 = vmatprep.subr.mxu0 0.0
    %714 = vmatpush1.msra.mxu0 0.0
    %715 = vmatprep.subr.mxu0 0.0
    %716 = vmatpush1.msra.mxu0 0.0
    %717 = vmatprep.subr.mxu0 0.0
    %718 = vmatpush1.msra.mxu0 0.0
    %719 = vmatprep.subr.mxu0 0.0
    %720 = vmatpush1.msra.mxu0 0.0
    %721 = vmatprep.subr.mxu0 0.0
    %722 = vmatpush1.msra.mxu0 0.0
    %723 = vmatprep.subr.mxu0 0.0
    %724 = vmatpush1.msra.mxu0 0.0
    %725 = vmatprep.subr.mxu0 0.0
    %726 = vmatpush1.msra.mxu0 0.0
    %727 = vmatprep.subr.mxu0 0.0
    %728 = vmatpush1.msra.mxu0 0.0
    %729 = vmatprep.subr.mxu0 0.0
    %730 = vmatpush1.msra.mxu0 0.0
    %731 = vmatprep.subr.mxu0 0.0
    %732 = vmatpush1.msra.mxu0 0.0
    %733 = vmatprep.subr.mxu0 0.0
    %734 = vmatpush1.msra.mxu0 0.0
    %735 = vmatprep.subr.mxu0 0.0
    %736 = vmatpush1.msra.mxu0 0.0
    %737 = vmatprep.subr.mxu0 0.0
    %738 = vmatpush1.msra.mxu0 0.0
    %739 = vmatprep.subr.mxu0 0.0
    %740 = vmatpush1.msra.mxu0 0.0
    %741 = vmatprep.subr.mxu0 0.0
    %742 = vmatpush1.msra.mxu0 0.0
    %743 = vmatprep.subr.mxu0 0.0
    %744 = vmatpush1.msra.mxu0 0.0
    %745 = vmatprep.subr.mxu0 0.0
    %746 = vmatpush1.msra.mxu0 0.0
    %747 = vmatprep.subr.mxu0 0.0
    %748 = vmatpush1.msra.mxu0 0.0
    %749 = vmatprep.subr.mxu0 0.0
    %750 = vmatpush1.msra.mxu0 0.0
    %751 = vmatprep.subr.mxu0 0.0
    %752 = vmatpush1.msra.mxu0 0.0
    %753 = vmatprep.subr.mxu0 0.0
    %754 = vmatpush1.msra.mxu0 0.0
    %755 = vmatprep.mubr.f32.mxu0 0.0
    %756 = vmatmul.mubr.f32.gmra.mrb[0].mxu0 %v689
    %v757 = vpop.f32.mrb[0].mxu0
    %v758 = vadd.f32 0.0, %v757
    %v759 = vpop.f32.mrb[0].mxu0
    %760 = vdwg.mxu0
    %v761 = vadd.f32 %v688, %v758
    %v762 = vxor.u32 %v761, 2147483648
    %v763 = vmul.f32 %v762, 1.442695
    %v764 = vpow.pop %v763
    %v765 = vadd.f32 %v764, 1.0
    %v766 = vrcp.pop %v765
    %v767 = vmul.f32 1.0, %v766
    %v768 = vtanh.pop %v761
    %v769 = vmul.f32 %v767, %v674
    %771 = vrot.lane.b32.xlu0 %v768, 64
    %v772 = vpop.permute.xlu0 %771
    %v774 = vmul.f32 %v767, %v772
    %776 = vrot.lane.b32.xlu0 %v774, 32
    %v777 = vpop.permute.xlu0 %776
    %v779 = vadd.f32 %v769, %v777
    %v780 = vtanh.pop %v779
    %782 = vrot.lane.b32.xlu0 %v780, 64
    %v783 = vpop.permute.xlu0 %782
    %v785 = vmul.f32 %v767, %v783
    %787 = vrot.lane.b32.xlu0 %v785, 32
    %v788 = vpop.permute.xlu0 %787
    %s790 = scalar_lea.vmem [#allocation9], 48
    %791 = vst.msk [vmem:[%s790] sm:$0xff] %vm54, %v788
    %s792 = scalar_lea.vmem [#allocation4], 56
    %v793 = vld [vmem:[%s792] sm:$0xff]
    %v794 = vsel %vm54, %v788, 0
    %796 = vmatprep.subr.mxu0 0.0
    %797 = vmatpush1.msra.mxu0 %v47
    %798 = vmatprep.subr.mxu0 0.0
    %799 = vmatpush1.msra.mxu0 %v48
    %800 = vmatprep.subr.mxu0 0.0
    %801 = vmatpush1.msra.mxu0 %v49
    %802 = vmatprep.subr.mxu0 0.0
    %803 = vmatpush1.msra.mxu0 %v50
    %804 = vmatprep.subr.mxu0 0.0
    %805 = vmatpush1.msra.mxu0 0.0
    %806 = vmatprep.subr.mxu0 0.0
    %807 = vmatpush1.msra.mxu0 0.0
    %808 = vmatprep.subr.mxu0 0.0
    %809 = vmatpush1.msra.mxu0 0.0
    %810 = vmatprep.subr.mxu0 0.0
    %811 = vmatpush1.msra.mxu0 0.0
    %812 = vmatprep.subr.mxu0 0.0
    %813 = vmatpush1.msra.mxu0 0.0
    %814 = vmatprep.subr.mxu0 0.0
    %815 = vmatpush1.msra.mxu0 0.0
    %816 = vmatprep.subr.mxu0 0.0
    %817 = vmatpush1.msra.mxu0 0.0
    %818 = vmatprep.subr.mxu0 0.0
    %819 = vmatpush1.msra.mxu0 0.0
    %820 = vmatprep.subr.mxu0 0.0
    %821 = vmatpush1.msra.mxu0 0.0
    %822 = vmatprep.subr.mxu0 0.0
    %823 = vmatpush1.msra.mxu0 0.0
    %824 = vmatprep.subr.mxu0 0.0
    %825 = vmatpush1.msra.mxu0 0.0
    %826 = vmatprep.subr.mxu0 0.0
    %827 = vmatpush1.msra.mxu0 0.0
    %828 = vmatprep.subr.mxu0 0.0
    %829 = vmatpush1.msra.mxu0 0.0
    %830 = vmatprep.subr.mxu0 0.0
    %831 = vmatpush1.msra.mxu0 0.0
    %832 = vmatprep.subr.mxu0 0.0
    %833 = vmatpush1.msra.mxu0 0.0
    %834 = vmatprep.subr.mxu0 0.0
    %835 = vmatpush1.msra.mxu0 0.0
    %836 = vmatprep.subr.mxu0 0.0
    %837 = vmatpush1.msra.mxu0 0.0
    %838 = vmatprep.subr.mxu0 0.0
    %839 = vmatpush1.msra.mxu0 0.0
    %840 = vmatprep.subr.mxu0 0.0
    %841 = vmatpush1.msra.mxu0 0.0
    %842 = vmatprep.subr.mxu0 0.0
    %843 = vmatpush1.msra.mxu0 0.0
    %844 = vmatprep.subr.mxu0 0.0
    %845 = vmatpush1.msra.mxu0 0.0
    %846 = vmatprep.subr.mxu0 0.0
    %847 = vmatpush1.msra.mxu0 0.0
    %848 = vmatprep.subr.mxu0 0.0
    %849 = vmatpush1.msra.mxu0 0.0
    %850 = vmatprep.subr.mxu0 0.0
    %851 = vmatpush1.msra.mxu0 0.0
    %852 = vmatprep.subr.mxu0 0.0
    %853 = vmatpush1.msra.mxu0 0.0
    %854 = vmatprep.subr.mxu0 0.0
    %855 = vmatpush1.msra.mxu0 0.0
    %856 = vmatprep.subr.mxu0 0.0
    %857 = vmatpush1.msra.mxu0 0.0
    %858 = vmatprep.subr.mxu0 0.0
    %859 = vmatpush1.msra.mxu0 0.0
    %860 = vmatprep.mubr.f32.mxu0 0.0
    %861 = vmatmul.mubr.f32.gmra.mrb[0].mxu0 %v794
    %v862 = vpop.f32.mrb[0].mxu0
    %v863 = vadd.f32 0.0, %v862
    %v864 = vpop.f32.mrb[0].mxu0
    %865 = vdwg.mxu0
    %v866 = vadd.f32 %v793, %v863
    %v867 = vxor.u32 %v866, 2147483648
    %v868 = vmul.f32 %v867, 1.442695
    %v869 = vpow.pop %v868
    %v870 = vadd.f32 %v869, 1.0
    %v871 = vrcp.pop %v870
    %v872 = vmul.f32 1.0, %v871
    %v873 = vtanh.pop %v866
    %v874 = vmul.f32 %v872, %v779
    %876 = vrot.lane.b32.xlu0 %v873, 64
    %v877 = vpop.permute.xlu0 %876
    %v879 = vmul.f32 %v872, %v877
    %881 = vrot.lane.b32.xlu0 %v879, 32
    %v882 = vpop.permute.xlu0 %881
    %v884 = vadd.f32 %v874, %v882
    %v885 = vtanh.pop %v884
    %887 = vrot.lane.b32.xlu0 %v885, 64
    %v888 = vpop.permute.xlu0 %887
    %v890 = vmul.f32 %v872, %v888
    %892 = vrot.lane.b32.xlu0 %v890, 32
    %v893 = vpop.permute.xlu0 %892
    %s895 = scalar_lea.vmem [#allocation9], 56
    %896 = vst.msk [vmem:[%s895] sm:$0xff] %vm54, %v893
    %897 = vst.msk [vmem:[#allocation2] sm:$0xff] %vm54, %v893
    %899 = vrot.lane.b32.xlu0 %v884, 96
    %v900 = vpop.permute.xlu0 %899
    %902 = vst.msk [vmem:[#allocation3] sm:$0xff] %vm54, %v900
    // Predicated region
    $region22: #{tpu_custom_call.1} parent=1 // pred_check
      _
    $region23: #{tpu_custom_call.1} parent=1 // pred_check_branch
      %904 = sbr.rel (0) target = $region25
    $region24: #{tpu_custom_call.1} parent=1 // pred_region
      %s906 = ssub.s32 1024, 1024
      %907 = vsyncadd [#allocation6], %s906
      %s908 = sshll.u32 [#allocation9], 4
      %s909 = int_to_ptr.vmem [resolvable:$true] %s908
      %914 = dma.vmem_to_hbm [thread:$0]  %s909, 1024, %s2, [#allocation6], 128, 128, 8
    $region25: #{tpu_custom_call.1} parent=1 // pred_fallthru
      _
    // Predicated region
    $region26: #{tpu_custom_call.1} parent=1 // pred_check
      _
    $region27: #{tpu_custom_call.1} parent=1 // pred_check_branch
      %916 = sbr.rel (0) target = $region29
    $region28: #{tpu_custom_call.1} parent=1 // pred_region
      %917 = dma.done [#allocation6], 1024
    $region29: #{tpu_custom_call.1} parent=1 // pred_fallthru
      _
    %918 = vsyncpa [#allocation5], 1
    %919 = vsyncpa [#allocation8], 1
    %920 = vsyncpa [#allocation6], 1

</llo_original>
